<compile_context>
chip_gen: v6e
topology: v6e:2x2x1
jax: 0.10.0
libtpu: 0.0.40
codegen_flags: <defaults>
</compile_context>

<pallas_src>
import functools

import jax
import jax.numpy as jnp
from jax.experimental import pallas as pl
from jax.experimental.pallas import tpu as pltpu

_EPS = 1e-07
_R = 8.314               # gas constant J/(mol*K), as used by diffthermo's GibbsFE
_LANES = 128
_SUBLANES = 8
_HALF = _LANES // 2      # 64: alpha in lanes [0:64), beta in lanes [64:128)
_TILE_PROBS = _SUBLANES * _HALF   # 512 independent problems per (8,128) tile


def _fixed_point_kernel(params_ref, x_ref, t_ref, out_ref, *,
                        n_params: int, num_iters: int):
    # params_ref: SMEM f32[n_params]           = [Omega0, ..., Omega_{k-1}, G0]
    # x_ref:      VMEM f32[8, 128]  packed: lanes [0:64)=x_alpha, [64:128)=x_beta
    # t_ref:      VMEM f32[8, 128]  temperature (same value in both lane halves)
    # out_ref:    VMEM f32[8, 128]  packed updated compositions (same layout)

    # Hoist all SMEM scalar reads out of the iteration loop (no per-iter sld /
    # re-broadcast; JAX does not CSE broadcast_in_dim).
    rt = _R * t_ref[...]                                  # f32[8,128]
    g0 = params_ref[n_params - 1]
    omegas = [params_ref[i] for i in range(n_params - 1)]

    def g_and_mu(v):
        """Gibbs free energy and analytic chemical potential, elementwise."""
        omv = 1.0 - v
        p = v * omv                    # x(1-x)
        tt = 1.0 - 2.0 * v             # (1-2x)
        log_v = jnp.log(v)
        log_omv = jnp.log(omv)

        # Simultaneous Horner:  poly(tt) = sum_i Omega_i tt^i,  dpoly = d/d(tt)
        poly = jnp.zeros_like(v)
        dpoly = jnp.zeros_like(v)
        for i in range(n_params - 2, -1, -1):   # static loop over RK coeffs
            dpoly = dpoly * tt + poly
            poly = poly * tt + omegas[i]

        g = g0 * v + rt * (v * log_v + omv * log_omv) + p * poly
        # d/dx [x(1-x) * poly(1-2x)] = (1-2x)*poly - 2*x(1-x)*dpoly
        mu = g0 + rt * (log_v - log_omv) + tt * poly - 2.0 * p * dpoly
        return g, mu

    def step(v):
        g, mu = g_and_mu(v)                               # ONE call on packed tile
        g_other = pltpu.roll(g, shift=_HALF, axis=1)      # other phase's g (XLU)
        v_other = pltpu.roll(v, shift=_HALF, axis=1)      # other phase's x (XLU)
        # Unified update for both lane halves:
        #   alpha lanes: x_beta  - (g_right - g_left)/(mu_left  + eps)
        #   beta  lanes: x_alpha + (g_right - g_left)/(mu_right + eps)
        # Exact divide kept for parity with the torch/autograd reference.
        new = v_other - (g_other - g) / (mu + _EPS)
        return jnp.clip(new, _EPS, 1.0 - _EPS)

    v = x_ref[...]
    if num_iters <= 16:
        for _ in range(num_iters):                        # static unroll
            v = step(v)
    else:
        v = jax.lax.fori_loop(0, num_iters, lambda _, c: step(c), v, unroll=4)
    out_ref[...] = v


@functools.partial(jax.jit, static_argnames=("num_iters",))
def _fixed_point_batched_jit(x, params, t, num_iters):
    # x: f32[B, 2], params: f32[P], t: f32[B]
    B = x.shape[0]
    n_params = int(params.shape[0])
    num_tiles = max(1, -(-B // _TILE_PROBS))              # ceil(B / 512), static
    bp = num_tiles * _TILE_PROBS
    pad = bp - B

    # Pack: rows = num_tiles*8; lanes [0:64)=alpha, [64:128)=beta.  Padded
    # problems get a safe interior composition so logs stay finite.
    xa = jnp.pad(x[:, 0], (0, pad), constant_values=0.5)
    xb = jnp.pad(x[:, 1], (0, pad), constant_values=0.5)
    tp = jnp.pad(t, (0, pad), constant_values=300.0)
    rows = num_tiles * _SUBLANES
    x_packed = jnp.concatenate(
        [xa.reshape(rows, _HALF), xb.reshape(rows, _HALF)], axis=-1)
    t_half = tp.reshape(rows, _HALF)
    t_packed = jnp.concatenate([t_half, t_half], axis=-1)

    out = pl.pallas_call(
        functools.partial(_fixed_point_kernel,
                          n_params=n_params, num_iters=num_iters),
        out_shape=jax.ShapeDtypeStruct((rows, _LANES), jnp.float32),
        grid=(num_tiles,),
        in_specs=[
            pl.BlockSpec(memory_space=pltpu.SMEM),                    # RK params + G0
            pl.BlockSpec((_SUBLANES, _LANES), lambda i: (i, 0)),      # packed x
            pl.BlockSpec((_SUBLANES, _LANES), lambda i: (i, 0)),      # packed T
        ],
        out_specs=pl.BlockSpec((_SUBLANES, _LANES), lambda i: (i, 0)),
        compiler_params=pltpu.CompilerParams(
            dimension_semantics=("parallel",)),            # 2x on v7x for >=2 tiles
    )(params, x_packed, t_packed)

    out_a = out[:, :_HALF].reshape(bp)[:B]
    out_b = out[:, _HALF:].reshape(bp)[:B]
    return jnp.stack([out_a, out_b], axis=-1)


def fixed_point_operation(x, params, T, num_iters=1):
    """Single problem, matching FixedPointOperation.forward (num_iters=1).

    x: f32[2]; params: f32[P] = [Omega0..Omega_{k-1}, G0]; T: scalar.
    """
    # TODO(synk): inputs are not clipped before the first log, to keep exact
    # parity with the torch module (which also allows NaN for x outside (0,1)).
    x = jnp.asarray(x, jnp.float32).reshape(1, 2)
    params = jnp.asarray(params, jnp.float32)
    t = jnp.asarray(T, jnp.float32).reshape(1)
    return _fixed_point_batched_jit(x, params, t, int(num_iters))[0]


def fixed_point_operation_batched(x, params, T, num_iters=1):
    """Batched: x f32[B,2], T scalar or f32[B]. Returns f32[B,2]."""
    x = jnp.asarray(x, jnp.float32)
    params = jnp.asarray(params, jnp.float32)
    t = jnp.broadcast_to(jnp.asarray(T, jnp.float32), (x.shape[0],))
    return _fixed_point_batched_jit(x, params, t, int(num_iters))


# ---------------- pure-JAX reference (autodiff for mu, mirrors torch code) ---
def _gibbs_ref(x, params, T):
    g0 = params[-1]
    g = g0 * x + _R * T * (x * jnp.log(x) + (1.0 - x) * jnp.log(1.0 - x))
    for i in range(params.shape[0] - 1):
        g = g + params[i] * (1.0 - 2.0 * x) ** i * x * (1.0 - x)
    return g


def _ref_forward(x, params, T):
    x_a, x_b = x[0], x[1]
    g_r = _gibbs_ref(x_b, params, T)
    g_l = _gibbs_ref(x_a, params, T)
    mu_r = jax.grad(_gibbs_ref, argnums=0)(x_b, params, T)
    mu_l = jax.grad(_gibbs_ref, argnums=0)(x_a, params, T)
    xa_new = jnp.clip(x_b - (g_r - g_l) / (mu_l + _EPS), _EPS, 1.0 - _EPS)
    xb_new = jnp.clip(x_a + (g_r - g_l) / (mu_r + _EPS), _EPS, 1.0 - _EPS)
    return jnp.stack([xa_new, xb_new])


if __name__ == "__main__":
    key = jax.random.PRNGKey(0)
    k_params, k_rest = jax.random.split(key)
    k_x, k_t = jax.random.split(k_rest)

    # params_list = [Omega0, Omega1, Omega2, Omega3, G0], deterministic init.
    n_rk = 4
    params = (jax.random.normal(k_params, (n_rk + 1,), dtype=jnp.float32)
              * 5000.0)
    T = 300.0

    # --- single problem: exact match to FixedPointOperation.forward ----------
    x = jnp.array([0.2, 0.8], dtype=jnp.float32)
    out = jax.block_until_ready(fixed_point_operation(x, params, T))
    ref = _ref_forward(x, params, jnp.float32(T))
    assert out.shape == (2,) and out.dtype == jnp.float32
    assert jnp.allclose(out, ref, rtol=1e-4, atol=1e-5), (out, ref)

    # --- small batch (single tile) -------------------------------------------
    B1 = 6
    xa = jax.random.uniform(k_x, (B1,), minval=0.05, maxval=0.45)
    xb = jax.random.uniform(jax.random.fold_in(k_x, 1), (B1,),
                            minval=0.55, maxval=0.95)
    xs = jnp.stack([xa, xb], axis=-1).astype(jnp.float32)
    Ts = jax.random.uniform(k_t, (B1,), minval=250.0, maxval=350.0
                            ).astype(jnp.float32)
    out_b = jax.block_until_ready(fixed_point_operation_batched(xs, params, Ts))
    ref_b = jax.vmap(lambda xx, tt: _ref_forward(xx, params, tt))(xs, Ts)
    assert out_b.shape == (B1, 2)
    assert jnp.allclose(out_b, ref_b, rtol=1e-3, atol=1e-3), (out_b, ref_b)

    # --- larger batch spanning two tiles (exercises the parallel grid) -------
    B2 = 520
    xa2 = jax.random.uniform(jax.random.fold_in(k_x, 2), (B2,),
                             minval=0.05, maxval=0.45)
    xb2 = jax.random.uniform(jax.random.fold_in(k_x, 3), (B2,),
                             minval=0.55, maxval=0.95)
    xs2 = jnp.stack([xa2, xb2], axis=-1).astype(jnp.float32)
    Ts2 = jax.random.uniform(jax.random.fold_in(k_t, 1), (B2,),
                             minval=250.0, maxval=350.0).astype(jnp.float32)
    out_b2 = jax.block_until_ready(
        fixed_point_operation_batched(xs2, params, Ts2))
    ref_b2 = jax.vmap(lambda xx, tt: _ref_forward(xx, params, tt))(xs2, Ts2)
    assert out_b2.shape == (B2, 2)
    assert jnp.allclose(out_b2, ref_b2, rtol=1e-3, atol=1e-3)

    # --- fused multi-step fixed-point iteration inside one pallas_call -------
    out_it = jax.block_until_ready(
        fixed_point_operation(x, params, T, num_iters=6))
    assert out_it.shape == (2,) and out_it.dtype == jnp.float32
    assert bool(jnp.all(jnp.isfinite(out_it)))
    assert bool(jnp.all((out_it >= _EPS) & (out_it <= 1.0 - _EPS)))

    print("KERNEL_OK")
</pallas_src>

<mosaic_0001>
module attributes {stable_mosaic.version = 11 : i64} {
  func.func @_fixed_point_kernel(%arg0: i32, %arg1: memref<5xf32, #tpu.memory_space<smem>>, %arg2: memref<8x128xf32, #tpu.memory_space<vmem>>, %arg3: memref<8x128xf32, #tpu.memory_space<vmem>>, %arg4: memref<8x128xf32, #tpu.memory_space<vmem>>) attributes {dimension_semantics = [#tpu.dimension_semantics<parallel>], iteration_bounds = array<i64: 1>, scalar_prefetch = 0 : i64, scratch_operands = 0 : i64, tpu.core_type = #tpu.core_type<tc>, window_params = [{transform_indices = @transform_0, window_bounds = array<i64: 5>}, {transform_indices = @transform_1, window_bounds = array<i64: 8, 128>}, {transform_indices = @transform_2, window_bounds = array<i64: 8, 128>}, {transform_indices = @transform_3, window_bounds = array<i64: 8, 128>}]} {
    %c0 = arith.constant 0 : index
    %c0_0 = arith.constant 0 : index
    %0 = vector.load %arg3[%c0, %c0_0] : memref<8x128xf32, #tpu.memory_space<vmem>>, vector<8x128xf32>
    %cst = arith.constant 8.314000e+00 : f32
    %1 = vector.broadcast %cst : f32 to vector<8x128xf32>
    %2 = arith.mulf %1, %0 : vector<8x128xf32>
    %c4 = arith.constant 4 : index
    %3 = memref.load %arg1[%c4] : memref<5xf32, #tpu.memory_space<smem>>
    %c0_1 = arith.constant 0 : index
    %4 = memref.load %arg1[%c0_1] : memref<5xf32, #tpu.memory_space<smem>>
    %c1 = arith.constant 1 : index
    %5 = memref.load %arg1[%c1] : memref<5xf32, #tpu.memory_space<smem>>
    %c2 = arith.constant 2 : index
    %6 = memref.load %arg1[%c2] : memref<5xf32, #tpu.memory_space<smem>>
    %c3 = arith.constant 3 : index
    %7 = memref.load %arg1[%c3] : memref<5xf32, #tpu.memory_space<smem>>
    %c0_2 = arith.constant 0 : index
    %c0_3 = arith.constant 0 : index
    %8 = vector.load %arg2[%c0_2, %c0_3] : memref<8x128xf32, #tpu.memory_space<vmem>>, vector<8x128xf32>
    %cst_4 = arith.constant 1.000000e+00 : f32
    %9 = vector.broadcast %cst_4 : f32 to vector<8x128xf32>
    %10 = arith.subf %9, %8 : vector<8x128xf32>
    %11 = arith.mulf %8, %10 : vector<8x128xf32>
    %cst_5 = arith.constant 2.000000e+00 : f32
    %12 = vector.broadcast %cst_5 : f32 to vector<8x128xf32>
    %13 = arith.mulf %12, %8 : vector<8x128xf32>
    %cst_6 = arith.constant 1.000000e+00 : f32
    %14 = vector.broadcast %cst_6 : f32 to vector<8x128xf32>
    %15 = arith.subf %14, %13 : vector<8x128xf32>
    %16 = math.log %8 : vector<8x128xf32>
    %17 = math.log %10 : vector<8x128xf32>
    %cst_7 = arith.constant 0.000000e+00 : f32
    %18 = vector.broadcast %cst_7 : f32 to vector<8x128xf32>
    %cst_8 = arith.constant 0.000000e+00 : f32
    %19 = vector.broadcast %cst_8 : f32 to vector<8x128xf32>
    %20 = arith.mulf %19, %15 : vector<8x128xf32>
    %21 = arith.addf %20, %18 : vector<8x128xf32>
    %22 = arith.mulf %18, %15 : vector<8x128xf32>
    %23 = vector.broadcast %7 : f32 to vector<8x128xf32>
    %24 = arith.addf %22, %23 : vector<8x128xf32>
    %25 = arith.mulf %21, %15 : vector<8x128xf32>
    %26 = arith.addf %25, %24 : vector<8x128xf32>
    %27 = arith.mulf %24, %15 : vector<8x128xf32>
    %28 = vector.broadcast %6 : f32 to vector<8x128xf32>
    %29 = arith.addf %27, %28 : vector<8x128xf32>
    %30 = arith.mulf %26, %15 : vector<8x128xf32>
    %31 = arith.addf %30, %29 : vector<8x128xf32>
    %32 = arith.mulf %29, %15 : vector<8x128xf32>
    %33 = vector.broadcast %5 : f32 to vector<8x128xf32>
    %34 = arith.addf %32, %33 : vector<8x128xf32>
    %35 = arith.mulf %31, %15 : vector<8x128xf32>
    %36 = arith.addf %35, %34 : vector<8x128xf32>
    %37 = arith.mulf %34, %15 : vector<8x128xf32>
    %38 = vector.broadcast %4 : f32 to vector<8x128xf32>
    %39 = arith.addf %37, %38 : vector<8x128xf32>
    %40 = vector.broadcast %3 : f32 to vector<8x128xf32>
    %41 = arith.mulf %40, %8 : vector<8x128xf32>
    %42 = arith.mulf %8, %16 : vector<8x128xf32>
    %43 = arith.mulf %10, %17 : vector<8x128xf32>
    %44 = arith.addf %42, %43 : vector<8x128xf32>
    %45 = arith.mulf %2, %44 : vector<8x128xf32>
    %46 = arith.addf %41, %45 : vector<8x128xf32>
    %47 = arith.mulf %11, %39 : vector<8x128xf32>
    %48 = arith.addf %46, %47 : vector<8x128xf32>
    %49 = arith.subf %16, %17 : vector<8x128xf32>
    %50 = arith.mulf %2, %49 : vector<8x128xf32>
    %51 = vector.broadcast %3 : f32 to vector<8x128xf32>
    %52 = arith.addf %51, %50 : vector<8x128xf32>
    %53 = arith.mulf %15, %39 : vector<8x128xf32>
    %54 = arith.addf %52, %53 : vector<8x128xf32>
    %cst_9 = arith.constant 2.000000e+00 : f32
    %55 = vector.broadcast %cst_9 : f32 to vector<8x128xf32>
    %56 = arith.mulf %55, %11 : vector<8x128xf32>
    %57 = arith.mulf %56, %36 : vector<8x128xf32>
    %58 = arith.subf %54, %57 : vector<8x128xf32>
    %c64_i32 = arith.constant 64 : i32
    %59 = tpu.dynamic_rotate %48 by %c64_i32 dim 1 : vector<8x128xf32>, i32 -> vector<8x128xf32>
    %c64_i32_10 = arith.constant 64 : i32
    %60 = tpu.dynamic_rotate %8 by %c64_i32_10 dim 1 : vector<8x128xf32>, i32 -> vector<8x128xf32>
    %61 = arith.subf %59, %48 : vector<8x128xf32>
    %cst_11 = arith.constant 1.000000e-07 : f32
    %62 = vector.broadcast %cst_11 : f32 to vector<8x128xf32>
    %63 = arith.addf %58, %62 : vector<8x128xf32>
    %64 = arith.divf %61, %63 : vector<8x128xf32>
    %65 = arith.subf %60, %64 : vector<8x128xf32>
    %cst_12 = arith.constant 1.000000e-07 : f32
    %cst_13 = arith.constant 0.99999988 : f32
    %66 = vector.broadcast %cst_12 : f32 to vector<8x128xf32>
    %67 = arith.maximumf %66, %65 : vector<8x128xf32>
    %68 = vector.broadcast %cst_13 : f32 to vector<8x128xf32>
    %69 = arith.minimumf %68, %67 : vector<8x128xf32>
    %c0_14 = arith.constant 0 : index
    %c0_15 = arith.constant 0 : index
    %70 = vector.load %arg4[%c0_14, %c0_15] : memref<8x128xf32, #tpu.memory_space<vmem>>, vector<8x128xf32>
    tpu.vector_store %arg4[%c0_14, %c0_15], %69 {strides = array<i32>} : memref<8x128xf32, #tpu.memory_space<vmem>>, vector<8x128xf32>,
    return
  }
  func.func @transform_0(%arg0: i32) -> i32 {
    %c0_i32 = arith.constant 0 : i32
    %c0_i32_0 = arith.constant 0 : i32
    return %c0_i32 : i32
  }
  func.func @transform_1(%arg0: i32) -> (i32, i32) {
    %c0_i32 = arith.constant 0 : i32
    %c0_i32_0 = arith.constant 0 : i32
    return %arg0, %c0_i32 : i32, i32
  }
  func.func @transform_2(%arg0: i32) -> (i32, i32) {
    %c0_i32 = arith.constant 0 : i32
    %c0_i32_0 = arith.constant 0 : i32
    return %arg0, %c0_i32 : i32, i32
  }
  func.func @transform_3(%arg0: i32) -> (i32, i32) {
    %c0_i32 = arith.constant 0 : i32
    %c0_i32_0 = arith.constant 0 : i32
    return %arg0, %c0_i32 : i32, i32
  }
}

</mosaic_0001>

<llo_original>
// kernel: _fixed_point_batched_jit.1
$region0: #{_fixed_point_batched_jit.1}
  #allocation0 [shape = 'u32[]', space=smem, size = 0x4, offset = 0x4, fixed_abs, tag = 'smem constant byte address 0x4 - core index']
  #allocation1 [shape = 'u32[144,128]{1,0:T(1,128)}', space=vmem, size = 0x12000, scoped, tag = 'internal scratch']
  %s0 = inlined_call_operand.vmem [shape: f32[5], index: 0, kind: input, shape index: {}]
  %s1 = inlined_call_operand.vmem [shape: f32[8,128], index: 1, kind: input, shape index: {}]
  %s2 = inlined_call_operand.vmem [shape: f32[8,128], index: 2, kind: input, shape index: {}]
  %s3 = inlined_call_operand.vmem [shape: f32[8,128], index: 3, kind: output, shape index: {}]
  %s4 = sld [smem:[#allocation0]]
  $region26: #{_fixed_point_batched_jit.1} parent=0
    _
  %s6 = ssub.s32 1, %s4
  %s7 = scalar_select 0, %s6, %s4
  $region1: #{_fixed_point_batched_jit.1} parent=0
    #allocation2 [shape = 'u8[512]{0}', space=smem, size = 0x200, scoped, tag = 'input window, operand 0, single buffered']
    #allocation3 [shape = 's32[1]{0}', space=sflag, size = 0x4, scoped, tag = 'scoped memory for _fixed_point_batched_jit.1']
    %8 = vsyncpa [#allocation3], 0
    // Predicated region
    $region2: #{_fixed_point_batched_jit.1} parent=1 // pred_check
      _
    $region3: #{_fixed_point_batched_jit.1} parent=1 // pred_check_branch
      %10 = sbr.rel (0) target = $region5
    $region4: #{_fixed_point_batched_jit.1} parent=1 // pred_region
      %s12 = ssub.s32 16, 16
      %13 = vsyncadd [#allocation3], %s12
      %s15 = sshll.u32 %s0, 4
      %s16 = int_to_ptr.vmem [resolvable:$true] %s15
      %18 = dma.vmem_to_smem %s16, 16, [#allocation2], [#allocation3]
    $region5: #{_fixed_point_batched_jit.1} parent=1 // pred_fallthru
      _
    // Predicated region
    $region6: #{_fixed_point_batched_jit.1} parent=1 // pred_check
      _
    $region7: #{_fixed_point_batched_jit.1} parent=1 // pred_check_branch
      %20 = sbr.rel (0) target = $region9
    $region8: #{_fixed_point_batched_jit.1} parent=1 // pred_region
      _
    $region9: #{_fixed_point_batched_jit.1} parent=1 // pred_fallthru
      _
    // Predicated region
    $region10: #{_fixed_point_batched_jit.1} parent=1 // pred_check
      _
    $region11: #{_fixed_point_batched_jit.1} parent=1 // pred_check_branch
      %22 = sbr.rel (0) target = $region13
    $region12: #{_fixed_point_batched_jit.1} parent=1 // pred_region
      _
    $region13: #{_fixed_point_batched_jit.1} parent=1 // pred_fallthru
      _
    // Predicated region
    $region14: #{_fixed_point_batched_jit.1} parent=1 // pred_check
      _
    $region15: #{_fixed_point_batched_jit.1} parent=1 // pred_check_branch
      %24 = sbr.rel (0) target = $region17
    $region16: #{_fixed_point_batched_jit.1} parent=1 // pred_region
      %25 = dma.done [#allocation3], 16
    $region17: #{_fixed_point_batched_jit.1} parent=1 // pred_fallthru
      _
    %26 = sfence
    %v27 = vld [vmem:[%s2] sm:$0xff]
    %v28 = vmul.f32 %v27, 8.314
    %s29 = sld [smem:[#allocation2 + $0x4]]
    %s30 = sld [smem:[#allocation2]]
    %s31 = sld [smem:[#allocation2 + $0x1]]
    %s32 = sld [smem:[#allocation2 + $0x2]]
    %s33 = sld [smem:[#allocation2 + $0x3]]
    %v34 = vld [vmem:[%s1] sm:$0xff]
    %v35 = vsub.f32 1.0, %v34
    %v36 = vmul.f32 %v34, %v35
    %v37 = vmul.f32 %v34, 2.0
    %v38 = vsub.f32 1.0, %v37
    %v39 = vlog2.pop %v34
    %v40 = vmul.f32 %v39, 0.6931472
    %v41 = vlog2.pop %v35
    %v42 = vmul.f32 %v41, 0.6931472
    %v43 = vmul.f32 %v38, 0.0
    %v44 = vadd.f32 %v43, 0.0
    %v45 = vstv %s33
    %v46 = vadd.f32 %v43, %v45
    %v47 = vmul.f32 %v44, %v38
    %v48 = vadd.f32 %v47, %v46
    %v49 = vmul.f32 %v46, %v38
    %v50 = vstv %s32
    %v51 = vadd.f32 %v49, %v50
    %v52 = vmul.f32 %v48, %v38
    %v53 = vadd.f32 %v52, %v51
    %v54 = vmul.f32 %v51, %v38
    %v55 = vstv %s31
    %v56 = vadd.f32 %v54, %v55
    %v57 = vmul.f32 %v53, %v38
    %v58 = vadd.f32 %v57, %v56
    %v59 = vmul.f32 %v56, %v38
    %v60 = vstv %s30
    %v61 = vadd.f32 %v59, %v60
    %v62 = vstv %s29
    %v63 = vmul.f32 %v62, %v34
    %v64 = vmul.f32 %v34, %v40
    %v65 = vmul.f32 %v35, %v42
    %v66 = vadd.f32 %v64, %v65
    %v67 = vmul.f32 %v28, %v66
    %v68 = vadd.f32 %v63, %v67
    %v69 = vmul.f32 %v36, %v61
    %v70 = vadd.f32 %v68, %v69
    %v71 = vsub.f32 %v40, %v42
    %v72 = vmul.f32 %v28, %v71
    %v73 = vadd.f32 %v62, %v72
    %v74 = vmul.f32 %v38, %v61
    %v75 = vadd.f32 %v73, %v74
    %v76 = vmul.f32 %v36, 2.0
    %v77 = vmul.f32 %v76, %v58
    %v78 = vsub.f32 %v75, %v77
    %79 = vrot.lane.b32.xlu0 %v70, 64
    %v80 = vpop.permute.xlu0 %79
    %81 = vrot.lane.b32.xlu0 %v34, 64
    %v82 = vpop.permute.xlu0 %81
    %v83 = vsub.f32 %v80, %v70
    %v84 = vadd.f32 %v78, 1e-07
    %v85 = vrcp.pop %v84
    %v86 = vmul.f32 %v83, %v85
    %v87 = vsub.f32 %v82, %v86
    %v88 = vmax.f32 %v87, 1e-07
    %v89 = vmin.f32 %v88, 0.9999999
    %90 = vst [vmem:[%s3] sm:$0xff] %v89
    // Predicated region
    $region18: #{_fixed_point_batched_jit.1} parent=1 // pred_check
      _
    $region19: #{_fixed_point_batched_jit.1} parent=1 // pred_check_branch
      %92 = sbr.rel (0) target = $region21
    $region20: #{_fixed_point_batched_jit.1} parent=1 // pred_region
      _
    $region21: #{_fixed_point_batched_jit.1} parent=1 // pred_fallthru
      _
    // Predicated region
    $region22: #{_fixed_point_batched_jit.1} parent=1 // pred_check
      _
    $region23: #{_fixed_point_batched_jit.1} parent=1 // pred_check_branch
      %94 = sbr.rel (0) target = $region25
    $region24: #{_fixed_point_batched_jit.1} parent=1 // pred_region
      _
    $region25: #{_fixed_point_batched_jit.1} parent=1 // pred_fallthru
      _
    %95 = vsyncpa [#allocation3], 1

</llo_original>
